<compile_context>
chip_gen: v5e
topology: v5e:2x2
jax: 0.10.0
libtpu: 0.0.40
codegen_flags: <defaults>
</compile_context>

<pallas_src>
import jax
import jax.numpy as jnp
from jax import lax
from jax.experimental import pallas as pl
from jax.experimental.pallas import tpu as pltpu


# ----------------------------- Pallas kernel ------------------------------- #

def _ffn_kernel(x_ref, w1_ref, b1_ref, w2_ref, b2_ref, o_ref):
    # x_ref:  (bn, Cin,  ts)   spatial tile of bn batch elements (lanes = spatial)
    # w1_ref: (Ctmp, Cin)      fused conv1+BN weight
    # b1_ref: (Ctmp, 1)        fused conv1+BN bias
    # w2_ref: (Cout, Ctmp)     fused conv2+BN weight
    # b2_ref: (Cout, 1)        fused conv2+BN bias
    # o_ref:  (bn, Cout, ts)
    w1 = w1_ref[...]
    b1 = b1_ref[...]
    w2 = w2_ref[...]
    b2 = b2_ref[...]
    inv_sqrt2 = jnp.float32(0.7071067811865476)

    # Static unroll over the (small) batch block; each iteration is a pure
    # lane-dense 2D pass -> no cross-lane transposes, full-lane stores.
    for b in range(x_ref.shape[0]):
        x = x_ref[b]                                              # (Cin, ts) f32

        # conv1 (1x1) + BN  ==  affine:  (Ctmp, Cin) @ (Cin, ts)
        h = jnp.dot(w1, x, preferred_element_type=jnp.float32) + b1

        # exact (erf-based) GELU, matching torch.nn.GELU() default
        h = 0.5 * h * (1.0 + lax.erf(h * inv_sqrt2))

        # conv2 (1x1) + BN  ==  affine:  (Cout, Ctmp) @ (Ctmp, ts)
        y = jnp.dot(w2, h, preferred_element_type=jnp.float32) + b2

        # residual (Cin == Cout by module contract)
        o_ref[b] = (x + y).astype(o_ref.dtype)


# ------------------------- tiling / VMEM budgeting -------------------------- #

def _vmem_cap_bytes():
    try:
        return int(pltpu.get_tpu_info().vmem_capacity_bytes)
    except Exception:
        return 64 * 1024 * 1024   # conservative fallback (v7x per-core physical)


def _per_lane_bytes(cin, ctmp, cout):
    # f32 bytes per lane per batch element:
    # double-buffered x & out tiles + intermediate/temporaries.
    return 4 * (2 * cin + 2 * cout + 3 * ctmp)


def _choose_ts(s, cin, ctmp, cout):
    """Pick the spatial (lane) tile size: as large as the VMEM budget allows."""
    per_lane = _per_lane_bytes(cin, ctmp, cout)
    budget = _vmem_cap_bytes() // 4           # generous headroom on all chips
    cap = max(128, (budget // per_lane) // 128 * 128)
    if s <= cap:
        return s                              # whole spatial row; also handles ragged s
    t = cap
    while t >= 128:
        if s % t == 0:                        # divisor tile -> no padding, no masking
            return t
        t -= 128
    return s                                  # fallback: single block along spatial axis


def _choose_bn(n, ts, cin, ctmp, cout, max_unroll=8, target_lanes=4096):
    """Batch elements per grid step: cut per-step overhead when spatial is small."""
    per_lane = _per_lane_bytes(cin, ctmp, cout)
    budget = _vmem_cap_bytes() // 4
    bn = 1
    for cand in range(2, min(n, max_unroll) + 1):
        if n % cand:
            continue                          # only exact divisors -> no ragged batch block
        if cand * ts * per_lane > budget:
            break
        bn = cand
        if bn * ts >= target_lanes:
            break                             # tile already large enough to hide overhead
    return bn


# ------------------------------ Pallas wrapper ------------------------------ #

def _ffn_pallas(x3, w1, b1, w2, b2, *, ts, bn):
    n, cin, s = x3.shape
    ctmp = w1.shape[0]
    cout = w2.shape[0]
    assert s % ts == 0 and n % bn == 0

    # rough VMEM footprint (bytes) for the chosen tile
    est = (bn * ts * _per_lane_bytes(cin, ctmp, cout)
           + 4 * (cin * ctmp + ctmp * cout + ctmp + cout))
    ckwargs = dict(dimension_semantics=("parallel", "parallel"))
    if est > 12 * (1 << 20):   # only raise the scoped-VMEM limit when the default could be tight
        ckwargs["vmem_limit_bytes"] = int(min(_vmem_cap_bytes() // 2, 2 * est + (4 << 20)))

    return pl.pallas_call(
        _ffn_kernel,
        out_shape=jax.ShapeDtypeStruct((n, cout, s), x3.dtype),
        grid_spec=pltpu.PrefetchScalarGridSpec(
            num_scalar_prefetch=0,
            grid=(n // bn, s // ts),
            in_specs=[
                pl.BlockSpec((bn, cin, ts), lambda i, j: (i, 0, j)),
                pl.BlockSpec((ctmp, cin), lambda i, j: (0, 0)),   # resident (constant map)
                pl.BlockSpec((ctmp, 1), lambda i, j: (0, 0)),
                pl.BlockSpec((cout, ctmp), lambda i, j: (0, 0)),
                pl.BlockSpec((cout, 1), lambda i, j: (0, 0)),
            ],
            out_specs=pl.BlockSpec((bn, cout, ts), lambda i, j: (i, 0, j)),
        ),
        compiler_params=pltpu.CompilerParams(**ckwargs),
    )(x3, w1, b1, w2, b2)


def fuse_conv_bn(conv_w, gamma, beta, mean, var, eps=1e-5):
    """conv_w: (Cout, Cin) of a 1x1 conv.  Returns W (Cout, Cin), b (Cout, 1)."""
    inv_std = 1.0 / jnp.sqrt(var + eps)
    w_fused = conv_w * (gamma * inv_std)[:, None]            # (Cout, Cin)
    b_fused = (beta - mean * gamma * inv_std)[:, None]       # (Cout, 1)
    return w_fused.astype(jnp.float32), b_fused.astype(jnp.float32)


@jax.jit
def ffn_forward(x_nchw, params):
    """x_nchw: (N, C, H, W) float32 (PyTorch layout).  Returns (N, C, H, W)."""
    n, c, h, w = x_nchw.shape
    w1, b1, w2, b2 = params
    ctmp = w1.shape[0]
    cout = w2.shape[0]

    s = h * w
    x3 = x_nchw.reshape(n, c, s)          # free reshape: NCHW stays in place, spatial -> lanes
    ts = _choose_ts(s, c, ctmp, cout)
    bn = _choose_bn(n, ts, c, ctmp, cout)
    out3 = _ffn_pallas(x3, w1, b1, w2, b2, ts=ts, bn=bn)
    return out3.reshape(n, cout, h, w)    # free reshape back to NCHW


def ffn_reference(x_nchw, params):
    """Pure-JAX reference (same math, no Pallas)."""
    n, c, h, w = x_nchw.shape
    w1, b1, w2, b2 = params
    x = x_nchw.reshape(n, c, h * w)
    hd = jnp.einsum("oc,ncs->nos", w1, x) + b1[None]
    hd = 0.5 * hd * (1.0 + lax.erf(hd * 0.7071067811865476))
    y = jnp.einsum("oc,ncs->nos", w2, hd) + b2[None]
    return (x + y).reshape(n, c, h, w)


# --------------------------------- main ------------------------------------ #

if __name__ == "__main__":
    key = jax.random.PRNGKey(0)
    N, C, H, W = 2, 4, 16, 16           # in_channels == out_channels == 4
    C_TMP = 8                           # tmp_channels

    keys = jax.random.split(key, 12)

    # conv weights (1x1, bias=False): shapes (Cout, Cin, 1, 1) -> keep (Cout, Cin)
    conv1_w = jax.random.normal(keys[0], (C_TMP, C), jnp.float32) * 0.2
    conv2_w = jax.random.normal(keys[1], (C, C_TMP), jnp.float32) * 0.2

    # BatchNorm parameters (inference / running statistics).
    # NOTE: module init sets bn1.gamma=1, bn2.gamma=0 (which would zero the branch);
    # we use deterministic random values so the whole path is exercised.
    bn1_gamma = 1.0 + 0.1 * jax.random.normal(keys[2], (C_TMP,), jnp.float32)
    bn1_beta = 0.1 * jax.random.normal(keys[3], (C_TMP,), jnp.float32)
    bn1_mean = 0.1 * jax.random.normal(keys[4], (C_TMP,), jnp.float32)
    bn1_var = jnp.abs(1.0 + 0.1 * jax.random.normal(keys[5], (C_TMP,), jnp.float32))

    bn2_gamma = 1.0 + 0.1 * jax.random.normal(keys[6], (C,), jnp.float32)
    bn2_beta = 0.1 * jax.random.normal(keys[7], (C,), jnp.float32)
    bn2_mean = 0.1 * jax.random.normal(keys[8], (C,), jnp.float32)
    bn2_var = jnp.abs(1.0 + 0.1 * jax.random.normal(keys[9], (C,), jnp.float32))

    w1, b1 = fuse_conv_bn(conv1_w, bn1_gamma, bn1_beta, bn1_mean, bn1_var)
    w2, b2 = fuse_conv_bn(conv2_w, bn2_gamma, bn2_beta, bn2_mean, bn2_var)
    params = (w1, b1, w2, b2)

    x = jax.random.normal(keys[10], (N, C, H, W), jnp.float32)

    out = ffn_forward(x, params)
    out = jax.block_until_ready(out)

    ref = ffn_reference(x, params)
    assert out.shape == (N, C, H, W)
    assert jnp.allclose(out, ref, atol=1e-4, rtol=1e-4), "mismatch vs reference"

    print("KERNEL_OK")
</pallas_src>

<mosaic_0001>
module attributes {stable_mosaic.version = 11 : i64} {
  func.func @_ffn_kernel(%arg0: i32, %arg1: i32, %arg2: memref<2x4x256xf32, #tpu.memory_space<vmem>>, %arg3: memref<8x4xf32, #tpu.memory_space<vmem>>, %arg4: memref<8x1xf32, #tpu.memory_space<vmem>>, %arg5: memref<4x8xf32, #tpu.memory_space<vmem>>, %arg6: memref<4x1xf32, #tpu.memory_space<vmem>>, %arg7: memref<2x4x256xf32, #tpu.memory_space<vmem>>) attributes {dimension_semantics = [#tpu.dimension_semantics<parallel>, #tpu.dimension_semantics<parallel>], iteration_bounds = array<i64: 1, 1>, scalar_prefetch = 0 : i64, scratch_operands = 0 : i64, tpu.core_type = #tpu.core_type<tc>, window_params = [{transform_indices = @transform_0, window_bounds = array<i64: 2, 4, 256>}, {pipeline_mode = #tpu.pipeline_mode<synchronous>, transform_indices = @transform_1, window_bounds = array<i64: 8, 4>}, {pipeline_mode = #tpu.pipeline_mode<synchronous>, transform_indices = @transform_2, window_bounds = array<i64: 8, 1>}, {pipeline_mode = #tpu.pipeline_mode<synchronous>, transform_indices = @transform_3, window_bounds = array<i64: 4, 8>}, {pipeline_mode = #tpu.pipeline_mode<synchronous>, transform_indices = @transform_4, window_bounds = array<i64: 4, 1>}, {transform_indices = @transform_5, window_bounds = array<i64: 2, 4, 256>}]} {
    %c0 = arith.constant 0 : index
    %c0_0 = arith.constant 0 : index
    %0 = vector.load %arg3[%c0, %c0_0] : memref<8x4xf32, #tpu.memory_space<vmem>>, vector<8x4xf32>
    %c0_1 = arith.constant 0 : index
    %c0_2 = arith.constant 0 : index
    %1 = vector.load %arg4[%c0_1, %c0_2] : memref<8x1xf32, #tpu.memory_space<vmem>>, vector<8x1xf32>
    %c0_3 = arith.constant 0 : index
    %c0_4 = arith.constant 0 : index
    %2 = vector.load %arg5[%c0_3, %c0_4] : memref<4x8xf32, #tpu.memory_space<vmem>>, vector<4x8xf32>
    %c0_5 = arith.constant 0 : index
    %c0_6 = arith.constant 0 : index
    %3 = vector.load %arg6[%c0_5, %c0_6] : memref<4x1xf32, #tpu.memory_space<vmem>>, vector<4x1xf32>
    %c0_7 = arith.constant 0 : index
    %c0_8 = arith.constant 0 : index
    %c0_9 = arith.constant 0 : index
    %4 = vector.load %arg2[%c0_7, %c0_8, %c0_9] : memref<2x4x256xf32, #tpu.memory_space<vmem>>, vector<1x4x256xf32>
    %5 = vector.shape_cast %4 : vector<1x4x256xf32> to vector<4x256xf32>
    %cst = arith.constant dense<0.000000e+00> : vector<8x256xf32>
    %6 = tpu.matmul %0, %5, %cst {dimension_numbers = #tpu.dot_dimension_numbers<[1], [0], [0], [1], [0, 0, 1, 1], [], []>} : vector<8x4xf32>, vector<4x256xf32>, vector<8x256xf32> -> vector<8x256xf32>
    %7 = vector.broadcast %1 : vector<8x1xf32> to vector<8x256xf32>
    %8 = arith.addf %6, %7 : vector<8x256xf32>
    %cst_10 = arith.constant 5.000000e-01 : f32
    %9 = vector.broadcast %cst_10 : f32 to vector<8x256xf32>
    %10 = arith.mulf %9, %8 : vector<8x256xf32>
    %cst_11 = arith.constant 0.707106769 : f32
    %11 = vector.broadcast %cst_11 : f32 to vector<8x256xf32>
    %12 = arith.mulf %8, %11 : vector<8x256xf32>
    %13 = math.erf %12 : vector<8x256xf32>
    %cst_12 = arith.constant 1.000000e+00 : f32
    %14 = vector.broadcast %cst_12 : f32 to vector<8x256xf32>
    %15 = arith.addf %14, %13 : vector<8x256xf32>
    %16 = arith.mulf %10, %15 : vector<8x256xf32>
    %cst_13 = arith.constant dense<0.000000e+00> : vector<4x256xf32>
    %17 = tpu.matmul %2, %16, %cst_13 {dimension_numbers = #tpu.dot_dimension_numbers<[1], [0], [0], [1], [0, 0, 1, 1], [], []>} : vector<4x8xf32>, vector<8x256xf32>, vector<4x256xf32> -> vector<4x256xf32>
    %18 = vector.broadcast %3 : vector<4x1xf32> to vector<4x256xf32>
    %19 = arith.addf %17, %18 : vector<4x256xf32>
    %20 = arith.addf %5, %19 : vector<4x256xf32>
    %c0_14 = arith.constant 0 : index
    %c0_15 = arith.constant 0 : index
    %c0_16 = arith.constant 0 : index
    %21 = vector.load %arg7[%c0_14, %c0_15, %c0_16] : memref<2x4x256xf32, #tpu.memory_space<vmem>>, vector<1x4x256xf32>
    %22 = vector.shape_cast %21 : vector<1x4x256xf32> to vector<4x256xf32>
    %23 = vector.shape_cast %20 : vector<4x256xf32> to vector<1x4x256xf32>
    tpu.vector_store %arg7[%c0_14, %c0_15, %c0_16], %23 {strides = array<i32>} : memref<2x4x256xf32, #tpu.memory_space<vmem>>, vector<1x4x256xf32>,
    %c1 = arith.constant 1 : index
    %c0_17 = arith.constant 0 : index
    %c0_18 = arith.constant 0 : index
    %24 = vector.load %arg2[%c1, %c0_17, %c0_18] : memref<2x4x256xf32, #tpu.memory_space<vmem>>, vector<1x4x256xf32>
    %25 = vector.shape_cast %24 : vector<1x4x256xf32> to vector<4x256xf32>
    %cst_19 = arith.constant dense<0.000000e+00> : vector<8x256xf32>
    %26 = tpu.matmul %0, %25, %cst_19 {dimension_numbers = #tpu.dot_dimension_numbers<[1], [0], [0], [1], [0, 0, 1, 1], [], []>} : vector<8x4xf32>, vector<4x256xf32>, vector<8x256xf32> -> vector<8x256xf32>
    %27 = vector.broadcast %1 : vector<8x1xf32> to vector<8x256xf32>
    %28 = arith.addf %26, %27 : vector<8x256xf32>
    %cst_20 = arith.constant 5.000000e-01 : f32
    %29 = vector.broadcast %cst_20 : f32 to vector<8x256xf32>
    %30 = arith.mulf %29, %28 : vector<8x256xf32>
    %cst_21 = arith.constant 0.707106769 : f32
    %31 = vector.broadcast %cst_21 : f32 to vector<8x256xf32>
    %32 = arith.mulf %28, %31 : vector<8x256xf32>
    %33 = math.erf %32 : vector<8x256xf32>
    %cst_22 = arith.constant 1.000000e+00 : f32
    %34 = vector.broadcast %cst_22 : f32 to vector<8x256xf32>
    %35 = arith.addf %34, %33 : vector<8x256xf32>
    %36 = arith.mulf %30, %35 : vector<8x256xf32>
    %cst_23 = arith.constant dense<0.000000e+00> : vector<4x256xf32>
    %37 = tpu.matmul %2, %36, %cst_23 {dimension_numbers = #tpu.dot_dimension_numbers<[1], [0], [0], [1], [0, 0, 1, 1], [], []>} : vector<4x8xf32>, vector<8x256xf32>, vector<4x256xf32> -> vector<4x256xf32>
    %38 = vector.broadcast %3 : vector<4x1xf32> to vector<4x256xf32>
    %39 = arith.addf %37, %38 : vector<4x256xf32>
    %40 = arith.addf %25, %39 : vector<4x256xf32>
    %c1_24 = arith.constant 1 : index
    %c0_25 = arith.constant 0 : index
    %c0_26 = arith.constant 0 : index
    %41 = vector.load %arg7[%c1_24, %c0_25, %c0_26] : memref<2x4x256xf32, #tpu.memory_space<vmem>>, vector<1x4x256xf32>
    %42 = vector.shape_cast %41 : vector<1x4x256xf32> to vector<4x256xf32>
    %43 = vector.shape_cast %40 : vector<4x256xf32> to vector<1x4x256xf32>
    tpu.vector_store %arg7[%c1_24, %c0_25, %c0_26], %43 {strides = array<i32>} : memref<2x4x256xf32, #tpu.memory_space<vmem>>, vector<1x4x256xf32>,
    return
  }
  func.func @transform_0(%arg0: i32, %arg1: i32) -> (i32, i32, i32) {
    %c0_i32 = arith.constant 0 : i32
    %c0_i32_0 = arith.constant 0 : i32
    return %arg0, %c0_i32, %arg1 : i32, i32, i32
  }
  func.func @transform_1(%arg0: i32, %arg1: i32) -> (i32, i32) {
    %c0_i32 = arith.constant 0 : i32
    %c0_i32_0 = arith.constant 0 : i32
    %c0_i32_1 = arith.constant 0 : i32
    return %c0_i32, %c0_i32_0 : i32, i32
  }
  func.func @transform_2(%arg0: i32, %arg1: i32) -> (i32, i32) {
    %c0_i32 = arith.constant 0 : i32
    %c0_i32_0 = arith.constant 0 : i32
    %c0_i32_1 = arith.constant 0 : i32
    return %c0_i32, %c0_i32_0 : i32, i32
  }
  func.func @transform_3(%arg0: i32, %arg1: i32) -> (i32, i32) {
    %c0_i32 = arith.constant 0 : i32
    %c0_i32_0 = arith.constant 0 : i32
    %c0_i32_1 = arith.constant 0 : i32
    return %c0_i32, %c0_i32_0 : i32, i32
  }
  func.func @transform_4(%arg0: i32, %arg1: i32) -> (i32, i32) {
    %c0_i32 = arith.constant 0 : i32
    %c0_i32_0 = arith.constant 0 : i32
    %c0_i32_1 = arith.constant 0 : i32
    return %c0_i32, %c0_i32_0 : i32, i32
  }
  func.func @transform_5(%arg0: i32, %arg1: i32) -> (i32, i32, i32) {
    %c0_i32 = arith.constant 0 : i32
    %c0_i32_0 = arith.constant 0 : i32
    return %arg0, %c0_i32, %arg1 : i32, i32, i32
  }
}

</mosaic_0001>

<llo_original>
// kernel: ffn_forward.1
$region0: #{ffn_forward.1}
  #allocation0 [shape = 'u32[]', space=smem, size = 0x4, offset = 0x4, fixed_abs, tag = 'smem constant byte address 0x4 - core index']
  #allocation1 [shape = 'u32[72,128]{1,0:T(1,128)}', space=vmem, size = 0x9000, scoped, tag = 'internal scratch']
  %s0 = inlined_call_operand.vmem [shape: f32[2,4,256], index: 0, kind: input, shape index: {}]
  %s1 = inlined_call_operand.vmem [shape: f32[8,4], index: 1, kind: input, shape index: {}]
  %s2 = inlined_call_operand.vmem [shape: f32[8,1], index: 2, kind: input, shape index: {}]
  %s3 = inlined_call_operand.vmem [shape: f32[4,8], index: 3, kind: input, shape index: {}]
  %s4 = inlined_call_operand.vmem [shape: f32[4,1], index: 4, kind: input, shape index: {}]
  %s5 = inlined_call_operand.vmem [shape: f32[2,4,256], index: 5, kind: output, shape index: {}]
  %s6 = sld [smem:[#allocation0]]
  $region30: #{ffn_forward.1} parent=0
    _
  %s8 = ssub.s32 1, %s6
  %s9 = scalar_select 0, %s8, %s6
  // Predicated region
  $region2: #{ffn_forward.1} parent=0 // pred_check
    _
  $region3: #{ffn_forward.1} parent=0 // pred_check_branch
    %11 = sbr.rel (0) target = $region5
  $region4: #{ffn_forward.1} parent=0 // pred_region
    _
  $region5: #{ffn_forward.1} parent=0 // pred_fallthru
    _
  // Predicated region
  $region6: #{ffn_forward.1} parent=0 // pred_check
    _
  $region7: #{ffn_forward.1} parent=0 // pred_check_branch
    %13 = sbr.rel (0) target = $region9
  $region8: #{ffn_forward.1} parent=0 // pred_region
    _
  $region9: #{ffn_forward.1} parent=0 // pred_fallthru
    _
  // Predicated region
  $region10: #{ffn_forward.1} parent=0 // pred_check
    _
  $region11: #{ffn_forward.1} parent=0 // pred_check_branch
    %15 = sbr.rel (0) target = $region13
  $region12: #{ffn_forward.1} parent=0 // pred_region
    _
  $region13: #{ffn_forward.1} parent=0 // pred_fallthru
    _
  // Predicated region
  $region14: #{ffn_forward.1} parent=0 // pred_check
    _
  $region15: #{ffn_forward.1} parent=0 // pred_check_branch
    %17 = sbr.rel (0) target = $region17
  $region16: #{ffn_forward.1} parent=0 // pred_region
    _
  $region17: #{ffn_forward.1} parent=0 // pred_fallthru
    _
  // Predicated region
  $region18: #{ffn_forward.1} parent=0 // pred_check
    _
  $region19: #{ffn_forward.1} parent=0 // pred_check_branch
    %19 = sbr.rel (0) target = $region21
  $region20: #{ffn_forward.1} parent=0 // pred_region
    _
  $region21: #{ffn_forward.1} parent=0 // pred_fallthru
    _
  %v20 = vld [vmem:[%s1] sm:$0xff]
  %v21 = vld [vmem:[%s2] sm:$0xff]
  %v22 = vld [vmem:[%s3] sm:$0xf]
  %v23 = vld [vmem:[%s4] sm:$0xf]
  %v24 = vld [vmem:[%s0] sm:$0xff]
  %26 = vset.pattern.permute.xlu0 0
  %27 = vperm.xlu0 %26, %v21
  %v28 = vpop.permute.xlu0 %27
  %31 = vst [vmem:[#allocation1] ss:$2 sm:$0xff] %v24
  %v32 = vld.sshfl [vmem:[#allocation1] sm:$0xff pattern:$0x75316420]
  %v33 = vld.sshfl [vmem:[#allocation1 + $0x8] sm:$0xff pattern:$0x75316420]
  %vm34 = vcmask 31744
  %v36 = vsel %vm34, %v20, 0
  %vm38 = vcmask 1043456
  %v39 = vsel %vm38, %v32, 0
  %v41 = vsel %vm38, %v33, 0
  %43 = vmatpush.msra.mxu0 0.0
  %44 = vmatpush.msra.mxu0 0.0
  %45 = vmatpush.msra.mxu0 0.0
  %46 = vmatpush.msra.mxu0 0.0
  %47 = vmatpush.msra.mxu0 0.0
  %48 = vmatpush.msra.mxu0 0.0
  %49 = vmatpush.msra.mxu0 0.0
  %50 = vmatpush.msra.mxu0 0.0
  %51 = vmatpush.msra.mxu0 0.0
  %52 = vmatpush.msra.mxu0 0.0
  %53 = vmatpush.msra.mxu0 0.0
  %54 = vmatpush.msra.mxu0 0.0
  %55 = vmatpush.msra.mxu0 0.0
  %56 = vmatpush.msra.mxu0 0.0
  %57 = vmatpush.msra.mxu0 0.0
  %58 = vmatpush.msra.mxu0 %v39
  %59 = vmatmul.f32.gmra.mxu0 %v36
  %v60 = vpop.f32.mrf.mxu0
  %v61 = vadd.f32 %v28, %v60
  %62 = vdwg.mxu0
  %63 = vmatpush.msra.mxu0 0.0
  %64 = vmatpush.msra.mxu0 0.0
  %65 = vmatpush.msra.mxu0 0.0
  %66 = vmatpush.msra.mxu0 0.0
  %67 = vmatpush.msra.mxu0 0.0
  %68 = vmatpush.msra.mxu0 0.0
  %69 = vmatpush.msra.mxu0 0.0
  %70 = vmatpush.msra.mxu0 0.0
  %71 = vmatpush.msra.mxu0 0.0
  %72 = vmatpush.msra.mxu0 0.0
  %73 = vmatpush.msra.mxu0 0.0
  %74 = vmatpush.msra.mxu0 0.0
  %75 = vmatpush.msra.mxu0 0.0
  %76 = vmatpush.msra.mxu0 0.0
  %77 = vmatpush.msra.mxu0 0.0
  %78 = vmatpush.msra.mxu0 %v41
  %79 = vmatmul.f32.gmra.mxu0 %v36
  %v80 = vpop.f32.mrf.mxu0
  %v81 = vadd.f32 %v28, %v80
  %82 = vdwg.mxu0
  %v83 = vmul.f32 %v61, 0.5
  %v84 = vmul.f32 %v81, 0.5
  %v85 = vmul.f32 %v61, 0.70710677
  %v86 = vmul.f32 %v81, 0.70710677
  %v87 = vmul.f32 %v85, %v85
  %v88 = vmin.f32 16.0, %v87
  %v89 = vmul.f32 %v88, 2.1237322e-06
  %v90 = vadd.f32 %v89, 0.00028619796
  %v91 = vmul.f32 %v88, %v90
  %v92 = vadd.f32 %v91, 0.0036580483
  %v93 = vmul.f32 %v88, %v92
  %v94 = vadd.f32 %v93, 0.05243302
  %v95 = vmul.f32 %v88, %v94
  %v96 = vadd.f32 %v95, 0.18741608
  %v97 = vmul.f32 %v88, %v96
  %v98 = vadd.f32 %v97, 1.1283791
  %v99 = vmul.f32 %v85, %v98
  %v100 = vmul.f32 %v88, 3.8918573e-05
  %v101 = vadd.f32 %v100, 0.001143296
  %v102 = vmul.f32 %v88, %v101
  %v103 = vadd.f32 %v102, 0.014752088
  %v104 = vmul.f32 %v88, %v103
  %v105 = vadd.f32 %v104, 0.112945676
  %v106 = vmul.f32 %v88, %v105
  %v107 = vadd.f32 %v106, 0.4994258
  %v108 = vmul.f32 %v88, %v107
  %v109 = vadd.f32 %v108, 1.0
  %v110 = vrcp.pop %v109
  %v111 = vmul.f32 %v109, %v110
  %v112 = vsub.f32 1.0, %v111
  %v113 = vmul.f32 %v110, %v112
  %v114 = vadd.f32 %v110, %v113
  %vm115 = vweird.f32 %v109
  %vm116 = vweird.f32 %v110
  %vm117 = vmor %vm115, %vm116
  %v118 = vsel %vm117, %v110, %v114
  %v119 = vand.u32 2147483647, %v109
  %vm120 = vcmp.eq.f32.partialorder %v119, 8.507059e+37
  %v121 = vand.u32 %v109, 2147483648
  %v122 = vor.u32 1.1754944e-38, %v121
  %v123 = vsel %vm120, %v122, %v118
  %v124 = vmul.f32 %v99, %v123
  %v125 = vmin.f32 %v124, 1.0
  %v126 = vmax.f32 %v125, -1.0
  %v127 = vmul.f32 %v86, %v86
  %v128 = vmin.f32 16.0, %v127
  %v129 = vmul.f32 %v128, 2.1237322e-06
  %v130 = vadd.f32 %v129, 0.00028619796
  %v131 = vmul.f32 %v128, %v130
  %v132 = vadd.f32 %v131, 0.0036580483
  %v133 = vmul.f32 %v128, %v132
  %v134 = vadd.f32 %v133, 0.05243302
  %v135 = vmul.f32 %v128, %v134
  %v136 = vadd.f32 %v135, 0.18741608
  %v137 = vmul.f32 %v128, %v136
  %v138 = vadd.f32 %v137, 1.1283791
  %v139 = vmul.f32 %v86, %v138
  %v140 = vmul.f32 %v128, 3.8918573e-05
  %v141 = vadd.f32 %v140, 0.001143296
  %v142 = vmul.f32 %v128, %v141
  %v143 = vadd.f32 %v142, 0.014752088
  %v144 = vmul.f32 %v128, %v143
  %v145 = vadd.f32 %v144, 0.112945676
  %v146 = vmul.f32 %v128, %v145
  %v147 = vadd.f32 %v146, 0.4994258
  %v148 = vmul.f32 %v128, %v147
  %v149 = vadd.f32 %v148, 1.0
  %v150 = vrcp.pop %v149
  %v151 = vmul.f32 %v149, %v150
  %v152 = vsub.f32 1.0, %v151
  %v153 = vmul.f32 %v150, %v152
  %v154 = vadd.f32 %v150, %v153
  %vm155 = vweird.f32 %v149
  %vm156 = vweird.f32 %v150
  %vm157 = vmor %vm155, %vm156
  %v158 = vsel %vm157, %v150, %v154
  %v159 = vand.u32 2147483647, %v149
  %vm160 = vcmp.eq.f32.partialorder %v159, 8.507059e+37
  %v161 = vand.u32 %v149, 2147483648
  %v162 = vor.u32 1.1754944e-38, %v161
  %v163 = vsel %vm160, %v162, %v158
  %v164 = vmul.f32 %v139, %v163
  %v165 = vmin.f32 %v164, 1.0
  %v166 = vmax.f32 %v165, -1.0
  %v167 = vadd.f32 %v126, 1.0
  %v168 = vadd.f32 %v166, 1.0
  %v169 = vmul.f32 %v83, %v167
  %v170 = vmul.f32 %v84, %v168
  %172 = vset.pattern.permute.xlu0 0
  %173 = vperm.xlu0 %172, %v23
  %v174 = vpop.permute.xlu0 %173
  %vm176 = vcmask 64512
  %v178 = vsel %vm176, %v22, 0
  %180 = vmatpush.msra.mxu0 0.0
  %181 = vmatpush.msra.mxu0 0.0
  %182 = vmatpush.msra.mxu0 0.0
  %183 = vmatpush.msra.mxu0 0.0
  %184 = vmatpush.msra.mxu0 0.0
  %185 = vmatpush.msra.mxu0 0.0
  %186 = vmatpush.msra.mxu0 0.0
  %187 = vmatpush.msra.mxu0 0.0
  %188 = vmatpush.msra.mxu0 0.0
  %189 = vmatpush.msra.mxu0 0.0
  %190 = vmatpush.msra.mxu0 0.0
  %191 = vmatpush.msra.mxu0 0.0
  %192 = vmatpush.msra.mxu0 0.0
  %193 = vmatpush.msra.mxu0 0.0
  %194 = vmatpush.msra.mxu0 0.0
  %195 = vmatpush.msra.mxu0 %v169
  %196 = vmatmul.f32.gmra.mxu0 %v178
  %v197 = vpop.f32.mrf.mxu0
  %v198 = vadd.f32 %v174, %v197
  %199 = vdwg.mxu0
  %200 = vmatpush.msra.mxu0 0.0
  %201 = vmatpush.msra.mxu0 0.0
  %202 = vmatpush.msra.mxu0 0.0
  %203 = vmatpush.msra.mxu0 0.0
  %204 = vmatpush.msra.mxu0 0.0
  %205 = vmatpush.msra.mxu0 0.0
  %206 = vmatpush.msra.mxu0 0.0
  %207 = vmatpush.msra.mxu0 0.0
  %208 = vmatpush.msra.mxu0 0.0
  %209 = vmatpush.msra.mxu0 0.0
  %210 = vmatpush.msra.mxu0 0.0
  %211 = vmatpush.msra.mxu0 0.0
  %212 = vmatpush.msra.mxu0 0.0
  %213 = vmatpush.msra.mxu0 0.0
  %214 = vmatpush.msra.mxu0 0.0
  %215 = vmatpush.msra.mxu0 %v170
  %216 = vmatmul.f32.gmra.mxu0 %v178
  %v217 = vpop.f32.mrf.mxu0
  %v218 = vadd.f32 %v174, %v217
  %219 = vdwg.mxu0
  %v222 = vrot.slane %v218, 4
  %v223 = vsel %vm38, %v198, %v222
  %v225 = vadd.f32 %v24, %v223
  %226 = vst [vmem:[%s5] sm:$0xff] %v225
  %s227 = scalar_lea.vmem %s0, 8
  %v228 = vld [vmem:[%s227] sm:$0xff]
  %230 = vst [vmem:[#allocation1] ss:$2 sm:$0xff] %v228
  %v231 = vld.sshfl [vmem:[#allocation1] sm:$0xff pattern:$0x75316420]
  %v232 = vld.sshfl [vmem:[#allocation1 + $0x8] sm:$0xff pattern:$0x75316420]
  %v233 = vsel %vm38, %v231, 0
  %v235 = vsel %vm38, %v232, 0
  %237 = vmatpush.msra.mxu0 0.0
  %238 = vmatpush.msra.mxu0 0.0
  %239 = vmatpush.msra.mxu0 0.0
  %240 = vmatpush.msra.mxu0 0.0
  %241 = vmatpush.msra.mxu0 0.0
  %242 = vmatpush.msra.mxu0 0.0
  %243 = vmatpush.msra.mxu0 0.0
  %244 = vmatpush.msra.mxu0 0.0
  %245 = vmatpush.msra.mxu0 0.0
  %246 = vmatpush.msra.mxu0 0.0
  %247 = vmatpush.msra.mxu0 0.0
  %248 = vmatpush.msra.mxu0 0.0
  %249 = vmatpush.msra.mxu0 0.0
  %250 = vmatpush.msra.mxu0 0.0
  %251 = vmatpush.msra.mxu0 0.0
  %252 = vmatpush.msra.mxu0 %v233
  %253 = vmatmul.f32.gmra.mxu0 %v36
  %v254 = vpop.f32.mrf.mxu0
  %v255 = vadd.f32 %v28, %v254
  %256 = vdwg.mxu0
  %257 = vmatpush.msra.mxu0 0.0
  %258 = vmatpush.msra.mxu0 0.0
  %259 = vmatpush.msra.mxu0 0.0
  %260 = vmatpush.msra.mxu0 0.0
  %261 = vmatpush.msra.mxu0 0.0
  %262 = vmatpush.msra.mxu0 0.0
  %263 = vmatpush.msra.mxu0 0.0
  %264 = vmatpush.msra.mxu0 0.0
  %265 = vmatpush.msra.mxu0 0.0
  %266 = vmatpush.msra.mxu0 0.0
  %267 = vmatpush.msra.mxu0 0.0
  %268 = vmatpush.msra.mxu0 0.0
  %269 = vmatpush.msra.mxu0 0.0
  %270 = vmatpush.msra.mxu0 0.0
  %271 = vmatpush.msra.mxu0 0.0
  %272 = vmatpush.msra.mxu0 %v235
  %273 = vmatmul.f32.gmra.mxu0 %v36
  %v274 = vpop.f32.mrf.mxu0
  %v275 = vadd.f32 %v28, %v274
  %276 = vdwg.mxu0
  %v277 = vmul.f32 %v255, 0.5
  %v278 = vmul.f32 %v275, 0.5
  %v279 = vmul.f32 %v255, 0.70710677
  %v280 = vmul.f32 %v275, 0.70710677
  %v281 = vmul.f32 %v279, %v279
  %v282 = vmin.f32 16.0, %v281
  %v283 = vmul.f32 %v282, 2.1237322e-06
  %v284 = vadd.f32 %v283, 0.00028619796
  %v285 = vmul.f32 %v282, %v284
  %v286 = vadd.f32 %v285, 0.0036580483
  %v287 = vmul.f32 %v282, %v286
  %v288 = vadd.f32 %v287, 0.05243302
  %v289 = vmul.f32 %v282, %v288
  %v290 = vadd.f32 %v289, 0.18741608
  %v291 = vmul.f32 %v282, %v290
  %v292 = vadd.f32 %v291, 1.1283791
  %v293 = vmul.f32 %v279, %v292
  %v294 = vmul.f32 %v282, 3.8918573e-05
  %v295 = vadd.f32 %v294, 0.001143296
  %v296 = vmul.f32 %v282, %v295
  %v297 = vadd.f32 %v296, 0.014752088
  %v298 = vmul.f32 %v282, %v297
  %v299 = vadd.f32 %v298, 0.112945676
  %v300 = vmul.f32 %v282, %v299
  %v301 = vadd.f32 %v300, 0.4994258
  %v302 = vmul.f32 %v282, %v301
  %v303 = vadd.f32 %v302, 1.0
  %v304 = vrcp.pop %v303
  %v305 = vmul.f32 %v303, %v304
  %v306 = vsub.f32 1.0, %v305
  %v307 = vmul.f32 %v304, %v306
  %v308 = vadd.f32 %v304, %v307
  %vm309 = vweird.f32 %v303
  %vm310 = vweird.f32 %v304
  %vm311 = vmor %vm309, %vm310
  %v312 = vsel %vm311, %v304, %v308
  %v313 = vand.u32 2147483647, %v303
  %vm314 = vcmp.eq.f32.partialorder %v313, 8.507059e+37
  %v315 = vand.u32 %v303, 2147483648
  %v316 = vor.u32 1.1754944e-38, %v315
  %v317 = vsel %vm314, %v316, %v312
  %v318 = vmul.f32 %v293, %v317
  %v319 = vmin.f32 %v318, 1.0
  %v320 = vmax.f32 %v319, -1.0
  %v321 = vmul.f32 %v280, %v280
  %v322 = vmin.f32 16.0, %v321
  %v323 = vmul.f32 %v322, 2.1237322e-06
  %v324 = vadd.f32 %v323, 0.00028619796
  %v325 = vmul.f32 %v322, %v324
  %v326 = vadd.f32 %v325, 0.0036580483
  %v327 = vmul.f32 %v322, %v326
  %v328 = vadd.f32 %v327, 0.05243302
  %v329 = vmul.f32 %v322, %v328
  %v330 = vadd.f32 %v329, 0.18741608
  %v331 = vmul.f32 %v322, %v330
  %v332 = vadd.f32 %v331, 1.1283791
  %v333 = vmul.f32 %v280, %v332
  %v334 = vmul.f32 %v322, 3.8918573e-05
  %v335 = vadd.f32 %v334, 0.001143296
  %v336 = vmul.f32 %v322, %v335
  %v337 = vadd.f32 %v336, 0.014752088
  %v338 = vmul.f32 %v322, %v337
  %v339 = vadd.f32 %v338, 0.112945676
  %v340 = vmul.f32 %v322, %v339
  %v341 = vadd.f32 %v340, 0.4994258
  %v342 = vmul.f32 %v322, %v341
  %v343 = vadd.f32 %v342, 1.0
  %v344 = vrcp.pop %v343
  %v345 = vmul.f32 %v343, %v344
  %v346 = vsub.f32 1.0, %v345
  %v347 = vmul.f32 %v344, %v346
  %v348 = vadd.f32 %v344, %v347
  %vm349 = vweird.f32 %v343
  %vm350 = vweird.f32 %v344
  %vm351 = vmor %vm349, %vm350
  %v352 = vsel %vm351, %v344, %v348
  %v353 = vand.u32 2147483647, %v343
  %vm354 = vcmp.eq.f32.partialorder %v353, 8.507059e+37
  %v355 = vand.u32 %v343, 2147483648
  %v356 = vor.u32 1.1754944e-38, %v355
  %v357 = vsel %vm354, %v356, %v352
  %v358 = vmul.f32 %v333, %v357
  %v359 = vmin.f32 %v358, 1.0
  %v360 = vmax.f32 %v359, -1.0
  %v361 = vadd.f32 %v320, 1.0
  %v362 = vadd.f32 %v360, 1.0
  %v363 = vmul.f32 %v277, %v361
  %v364 = vmul.f32 %v278, %v362
  %365 = vmatpush.msra.mxu0 0.0
  %366 = vmatpush.msra.mxu0 0.0
  %367 = vmatpush.msra.mxu0 0.0
  %368 = vmatpush.msra.mxu0 0.0
  %369 = vmatpush.msra.mxu0 0.0
  %370 = vmatpush.msra.mxu0 0.0
  %371 = vmatpush.msra.mxu0 0.0
  %372 = vmatpush.msra.mxu0 0.0
  %373 = vmatpush.msra.mxu0 0.0
  %374 = vmatpush.msra.mxu0 0.0
  %375 = vmatpush.msra.mxu0 0.0
  %376 = vmatpush.msra.mxu0 0.0
  %377 = vmatpush.msra.mxu0 0.0
  %378 = vmatpush.msra.mxu0 0.0
  %379 = vmatpush.msra.mxu0 0.0
  %380 = vmatpush.msra.mxu0 %v363
  %381 = vmatmul.f32.gmra.mxu0 %v178
  %v382 = vpop.f32.mrf.mxu0
  %v383 = vadd.f32 %v174, %v382
  %384 = vdwg.mxu0
  %385 = vmatpush.msra.mxu0 0.0
  %386 = vmatpush.msra.mxu0 0.0
  %387 = vmatpush.msra.mxu0 0.0
  %388 = vmatpush.msra.mxu0 0.0
  %389 = vmatpush.msra.mxu0 0.0
  %390 = vmatpush.msra.mxu0 0.0
  %391 = vmatpush.msra.mxu0 0.0
  %392 = vmatpush.msra.mxu0 0.0
  %393 = vmatpush.msra.mxu0 0.0
  %394 = vmatpush.msra.mxu0 0.0
  %395 = vmatpush.msra.mxu0 0.0
  %396 = vmatpush.msra.mxu0 0.0
  %397 = vmatpush.msra.mxu0 0.0
  %398 = vmatpush.msra.mxu0 0.0
  %399 = vmatpush.msra.mxu0 0.0
  %400 = vmatpush.msra.mxu0 %v364
  %401 = vmatmul.f32.gmra.mxu0 %v178
  %v402 = vpop.f32.mrf.mxu0
  %v403 = vadd.f32 %v174, %v402
  %404 = vdwg.mxu0
  %v407 = vrot.slane %v403, 4
  %v408 = vsel %vm38, %v383, %v407
  %v410 = vadd.f32 %v228, %v408
  %s411 = scalar_lea.vmem %s5, 8
  %412 = vst [vmem:[%s411] sm:$0xff] %v410
  // Predicated region
  $region22: #{ffn_forward.1} parent=0 // pred_check
    _
  $region23: #{ffn_forward.1} parent=0 // pred_check_branch
    %414 = sbr.rel (0) target = $region25
  $region24: #{ffn_forward.1} parent=0 // pred_region
    _
  $region25: #{ffn_forward.1} parent=0 // pred_fallthru
    _
  // Predicated region
  $region26: #{ffn_forward.1} parent=0 // pred_check
    _
  $region27: #{ffn_forward.1} parent=0 // pred_check_branch
    %416 = sbr.rel (0) target = $region29
  $region28: #{ffn_forward.1} parent=0 // pred_region
    _
  $region29: #{ffn_forward.1} parent=0 // pred_fallthru
    _

</llo_original>
